<compile_context>
chip_gen: v6e
topology: v6e:2x2x1
jax: 0.10.0
libtpu: 0.0.40
codegen_flags: <defaults>
</compile_context>

<pallas_src>
import jax
import jax.numpy as jnp
from jax.experimental import pallas as pl
from jax.experimental.pallas import tpu as pltpu

M1_DEFAULT = 2.0
M2_DEFAULT = 1.0

# ~2 MiB of rows per input tile  =>  4 inputs * 2 pipeline buffers ~= 16 MiB of
# streaming buffers plus a few tile-sized temporaries, comfortably inside the
# 32 MiB scoped-VMEM limit requested below on every TPU generation.
_TILE_BYTES_BUDGET = 2 * 1024 * 1024
_VMEM_LIMIT_BYTES = 32 * 1024 * 1024


def _round_up(x, m):
    return ((x + m - 1) // m) * m


def _pick_tile_rows(batch, feat, itemsize):
    rows = _TILE_BYTES_BUDGET // max(1, feat * itemsize)
    rows = min(rows, _round_up(batch, 8))       # never larger than (padded) batch
    rows = max(8, (rows // 8) * 8)              # sublane-aligned
    return rows


def _make_kernel(m1, m2, batch, tile_rows):
    inv_batch = 1.0 / float(batch)
    need_mask = (batch % tile_rows) != 0

    def kernel(a_ref, p_ref, n1_ref, n2_ref, out_ref, acc_ref):
        i = pl.program_id(0)

        @pl.when(i == 0)
        def _init():
            acc_ref[...] = jnp.zeros_like(acc_ref)

        a = a_ref[...]
        p = p_ref[...]
        n1 = n1_ref[...]
        n2 = n2_ref[...]

        # Differences in the input dtype; promote to f32 only for square+sum.
        dp = (a - p).astype(jnp.float32)
        dn = (a - n1).astype(jnp.float32)
        dn2 = (n1 - n2).astype(jnp.float32)

        sq_pos = dp * dp
        # Two cross-lane reductions per tile:
        #   s1 = d_pos - d_neg,   s2 = d_pos - d_neg2
        s1 = jnp.sum(sq_pos - dn * dn, axis=1, keepdims=True)      # (tb, 1)
        s2 = jnp.sum(sq_pos - dn2 * dn2, axis=1, keepdims=True)    # (tb, 1)

        loss = jnp.maximum(m1 + s1, 0.0) + jnp.maximum(m2 + s2, 0.0)

        if need_mask:
            row = (i * tile_rows
                   + jax.lax.broadcasted_iota(jnp.int32, (tile_rows, 1), 0))
            loss = jnp.where(row < batch, loss, 0.0)

        acc_ref[...] += jnp.sum(loss, axis=0, keepdims=True)        # (1, 1)

        @pl.when(i == pl.num_programs(0) - 1)
        def _finalize():
            out_ref[...] = acc_ref[...] * inv_batch

    return kernel


def adaptive_quadruplet_loss2(anchor, positive, negative1, negative2,
                              m1=M1_DEFAULT, m2=M2_DEFAULT, tile_rows=None):
    """Pallas TPU implementation of AdaptiveQuadrupletLoss2.forward (euclidean)."""
    assert anchor.shape == positive.shape == negative1.shape == negative2.shape
    assert anchor.ndim == 2
    batch, feat = anchor.shape
    itemsize = jnp.dtype(anchor.dtype).itemsize

    if tile_rows is None:
        tile_rows = _pick_tile_rows(batch, feat, itemsize)
    tile_rows = max(8, (int(tile_rows) // 8) * 8)   # keep sublane alignment
    num_tiles = pl.cdiv(batch, tile_rows)

    # TODO(synk): if feat is not a multiple of 128 (lane width), vregs / DMA
    # rows are only partially used; small-D callers should fold samples into a
    # lane-dense layout upstream for full HBM/VPU utilization.
    in_spec = pl.BlockSpec((tile_rows, feat), lambda i: (i, 0))
    out_spec = pl.BlockSpec((1, 1), lambda i: (0, 0))   # resident, written once

    out = pl.pallas_call(
        _make_kernel(float(m1), float(m2), batch, tile_rows),
        out_shape=jax.ShapeDtypeStruct((1, 1), jnp.float32),
        grid=(num_tiles,),
        in_specs=[in_spec, in_spec, in_spec, in_spec],
        out_specs=out_spec,
        scratch_shapes=[pltpu.VMEM((1, 1), jnp.float32)],
        compiler_params=pltpu.CompilerParams(
            dimension_semantics=("arbitrary",),
            vmem_limit_bytes=_VMEM_LIMIT_BYTES,
        ),
    )(anchor, positive, negative1, negative2)
    return out[0, 0]


def _reference(anchor, positive, negative1, negative2,
               m1=M1_DEFAULT, m2=M2_DEFAULT):
    d_pos = jnp.sum((anchor - positive) ** 2, axis=1)
    d_neg = jnp.sum((anchor - negative1) ** 2, axis=1)
    d_neg2 = jnp.sum((negative1 - negative2) ** 2, axis=1)
    loss = (jax.nn.relu(m1 + d_pos - d_neg)
            + jax.nn.relu(m2 + d_pos - d_neg2))
    return jnp.mean(loss)


if __name__ == "__main__":
    key = jax.random.PRNGKey(0)
    k_a, k_p, k_n1, k_n2 = jax.random.split(key, 4)

    # Small but representative: D is a multiple of 128 (lane-dense vregs) and
    # B is NOT a multiple of the tile, so the masked tail-tile path is hit.
    B, D = 200, 256
    anchor = jax.random.normal(k_a, (B, D), dtype=jnp.float32)
    positive = jax.random.normal(k_p, (B, D), dtype=jnp.float32)
    negative1 = jax.random.normal(k_n1, (B, D), dtype=jnp.float32)
    negative2 = jax.random.normal(k_n2, (B, D), dtype=jnp.float32)

    # Force several grid steps (pipelined streaming + masked tail tile); the
    # default (tile_rows=None) picks a much larger VMEM-budgeted tile.
    loss = adaptive_quadruplet_loss2(anchor, positive, negative1, negative2,
                                     tile_rows=64)
    loss = jax.block_until_ready(loss)

    ref = _reference(anchor, positive, negative1, negative2)
    assert jnp.allclose(loss, ref, rtol=1e-4, atol=1e-4), (loss, ref)

    print("KERNEL_OK")
</pallas_src>

<mosaic_0001>
module attributes {stable_mosaic.version = 11 : i64} {
  func.func @kernel(%arg0: i32, %arg1: memref<64x256xf32, #tpu.memory_space<vmem>>, %arg2: memref<64x256xf32, #tpu.memory_space<vmem>>, %arg3: memref<64x256xf32, #tpu.memory_space<vmem>>, %arg4: memref<64x256xf32, #tpu.memory_space<vmem>>, %arg5: memref<1x1xf32, #tpu.memory_space<vmem>>, %arg6: memref<1x1xf32, #tpu.memory_space<vmem>>) attributes {dimension_semantics = [#tpu.dimension_semantics<arbitrary>], iteration_bounds = array<i64: 4>, scalar_prefetch = 0 : i64, scratch_operands = 1 : i64, tpu.core_type = #tpu.core_type<tc>, window_params = [{transform_indices = @transform_0, window_bounds = array<i64: 64, 256>}, {transform_indices = @transform_1, window_bounds = array<i64: 64, 256>}, {transform_indices = @transform_2, window_bounds = array<i64: 64, 256>}, {transform_indices = @transform_3, window_bounds = array<i64: 64, 256>}, {pipeline_mode = #tpu.pipeline_mode<synchronous>, transform_indices = @transform_4, window_bounds = array<i64: 1, 1>}]} {
    %c0_i32 = arith.constant 0 : i32
    %0 = arith.cmpi eq, %arg0, %c0_i32 : i32
    %1 = arith.extui %0 : i1 to i32
    %c0_i32_0 = arith.constant 0 : i32
    %2 = arith.cmpi ne, %1, %c0_i32_0 : i32
    scf.if %2 {
      %cst_20 = arith.constant 0.000000e+00 : f32
      %44 = vector.broadcast %cst_20 : f32 to vector<1x1xf32>
      %c0_21 = arith.constant 0 : index
      %c0_22 = arith.constant 0 : index
      %45 = vector.load %arg6[%c0_21, %c0_22] : memref<1x1xf32, #tpu.memory_space<vmem>>, vector<1x1xf32>
      tpu.vector_store %arg6[%c0_21, %c0_22], %44 {strides = array<i32>} : memref<1x1xf32, #tpu.memory_space<vmem>>, vector<1x1xf32>,
    } else {
    }
    %c0 = arith.constant 0 : index
    %c0_1 = arith.constant 0 : index
    %3 = vector.load %arg1[%c0, %c0_1] : memref<64x256xf32, #tpu.memory_space<vmem>>, vector<64x256xf32>
    %c0_2 = arith.constant 0 : index
    %c0_3 = arith.constant 0 : index
    %4 = vector.load %arg2[%c0_2, %c0_3] : memref<64x256xf32, #tpu.memory_space<vmem>>, vector<64x256xf32>
    %c0_4 = arith.constant 0 : index
    %c0_5 = arith.constant 0 : index
    %5 = vector.load %arg3[%c0_4, %c0_5] : memref<64x256xf32, #tpu.memory_space<vmem>>, vector<64x256xf32>
    %c0_6 = arith.constant 0 : index
    %c0_7 = arith.constant 0 : index
    %6 = vector.load %arg4[%c0_6, %c0_7] : memref<64x256xf32, #tpu.memory_space<vmem>>, vector<64x256xf32>
    %7 = arith.subf %3, %4 : vector<64x256xf32>
    %8 = arith.subf %3, %5 : vector<64x256xf32>
    %9 = arith.subf %5, %6 : vector<64x256xf32>
    %10 = arith.mulf %7, %7 : vector<64x256xf32>
    %11 = arith.mulf %8, %8 : vector<64x256xf32>
    %12 = arith.subf %10, %11 : vector<64x256xf32>
    %cst = arith.constant dense<0.000000e+00> : vector<64xf32>
    %13 = vector.multi_reduction <add>, %12, %cst [1] : vector<64x256xf32> to vector<64xf32>
    %14 = vector.shape_cast %13 : vector<64xf32> to vector<64x1xf32>
    %15 = arith.mulf %9, %9 : vector<64x256xf32>
    %16 = arith.subf %10, %15 : vector<64x256xf32>
    %cst_8 = arith.constant dense<0.000000e+00> : vector<64xf32>
    %17 = vector.multi_reduction <add>, %16, %cst_8 [1] : vector<64x256xf32> to vector<64xf32>
    %18 = vector.shape_cast %17 : vector<64xf32> to vector<64x1xf32>
    %cst_9 = arith.constant 2.000000e+00 : f32
    %19 = vector.broadcast %cst_9 : f32 to vector<64x1xf32>
    %20 = arith.addf %19, %14 : vector<64x1xf32>
    %cst_10 = arith.constant 0.000000e+00 : f32
    %21 = vector.broadcast %cst_10 : f32 to vector<64x1xf32>
    %22 = arith.maximumf %20, %21 : vector<64x1xf32>
    %cst_11 = arith.constant 1.000000e+00 : f32
    %23 = vector.broadcast %cst_11 : f32 to vector<64x1xf32>
    %24 = arith.addf %23, %18 : vector<64x1xf32>
    %cst_12 = arith.constant 0.000000e+00 : f32
    %25 = vector.broadcast %cst_12 : f32 to vector<64x1xf32>
    %26 = arith.maximumf %24, %25 : vector<64x1xf32>
    %27 = arith.addf %22, %26 : vector<64x1xf32>
    %c64_i32 = arith.constant 64 : i32
    %28 = arith.muli %arg0, %c64_i32 : i32
    %29 = tpu.iota {dimensions = array<i32: 0>} : vector<64x1xi32>
    %30 = vector.broadcast %28 : i32 to vector<64x1xi32>
    %31 = arith.addi %30, %29 : vector<64x1xi32>
    %c200_i32 = arith.constant 200 : i32
    %32 = vector.broadcast %c200_i32 : i32 to vector<64x1xi32>
    %33 = arith.cmpi slt, %31, %32 : vector<64x1xi32>
    %cst_13 = arith.constant 0.000000e+00 : f32
    %34 = vector.broadcast %cst_13 : f32 to vector<64x1xf32>
    %35 = arith.select %33, %27, %34 : vector<64x1xi1>, vector<64x1xf32>
    %c0_14 = arith.constant 0 : index
    %c0_15 = arith.constant 0 : index
    %36 = vector.load %arg6[%c0_14, %c0_15] : memref<1x1xf32, #tpu.memory_space<vmem>>, vector<1x1xf32>
    %cst_16 = arith.constant dense<0.000000e+00> : vector<1xf32>
    %37 = vector.multi_reduction <add>, %35, %cst_16 [0] : vector<64x1xf32> to vector<1xf32>
    %38 = vector.shape_cast %37 : vector<1xf32> to vector<1x1xf32>
    %39 = arith.addf %36, %38 : vector<1x1xf32>
    %c0_17 = arith.constant 0 : index
    %c0_18 = arith.constant 0 : index
    %40 = vector.load %arg6[%c0_17, %c0_18] : memref<1x1xf32, #tpu.memory_space<vmem>>, vector<1x1xf32>
    tpu.vector_store %arg6[%c0_17, %c0_18], %39 {strides = array<i32>} : memref<1x1xf32, #tpu.memory_space<vmem>>, vector<1x1xf32>,
    %c3_i32 = arith.constant 3 : i32
    %41 = arith.cmpi eq, %arg0, %c3_i32 : i32
    %42 = arith.extui %41 : i1 to i32
    %c0_i32_19 = arith.constant 0 : i32
    %43 = arith.cmpi ne, %42, %c0_i32_19 : i32
    scf.if %43 {
      %c0_20 = arith.constant 0 : index
      %c0_21 = arith.constant 0 : index
      %44 = vector.load %arg6[%c0_20, %c0_21] : memref<1x1xf32, #tpu.memory_space<vmem>>, vector<1x1xf32>
      %cst_22 = arith.constant 5.000000e-03 : f32
      %45 = vector.broadcast %cst_22 : f32 to vector<1x1xf32>
      %46 = arith.mulf %44, %45 : vector<1x1xf32>
      %c0_23 = arith.constant 0 : index
      %c0_24 = arith.constant 0 : index
      %47 = vector.load %arg5[%c0_23, %c0_24] : memref<1x1xf32, #tpu.memory_space<vmem>>, vector<1x1xf32>
      tpu.vector_store %arg5[%c0_23, %c0_24], %46 {strides = array<i32>} : memref<1x1xf32, #tpu.memory_space<vmem>>, vector<1x1xf32>,
    } else {
    }
    return
  }
  func.func @transform_0(%arg0: i32) -> (i32, i32) {
    %c0_i32 = arith.constant 0 : i32
    %c0_i32_0 = arith.constant 0 : i32
    return %arg0, %c0_i32 : i32, i32
  }
  func.func @transform_1(%arg0: i32) -> (i32, i32) {
    %c0_i32 = arith.constant 0 : i32
    %c0_i32_0 = arith.constant 0 : i32
    return %arg0, %c0_i32 : i32, i32
  }
  func.func @transform_2(%arg0: i32) -> (i32, i32) {
    %c0_i32 = arith.constant 0 : i32
    %c0_i32_0 = arith.constant 0 : i32
    return %arg0, %c0_i32 : i32, i32
  }
  func.func @transform_3(%arg0: i32) -> (i32, i32) {
    %c0_i32 = arith.constant 0 : i32
    %c0_i32_0 = arith.constant 0 : i32
    return %arg0, %c0_i32 : i32, i32
  }
  func.func @transform_4(%arg0: i32) -> (i32, i32) {
    %c0_i32 = arith.constant 0 : i32
    %c0_i32_0 = arith.constant 0 : i32
    %c0_i32_1 = arith.constant 0 : i32
    return %c0_i32, %c0_i32_0 : i32, i32
  }
}

</mosaic_0001>

<llo_original>
// kernel: tpu_custom_call.1
$region0: #{tpu_custom_call.1}
  #allocation0 [shape = 'u32[]', space=smem, size = 0x4, offset = 0x4, fixed_abs, tag = 'smem constant byte address 0x4 - core index']
  #allocation1 [shape = 'u32[144,128]{1,0:T(1,128)}', space=vmem, size = 0x12000, scoped, tag = 'internal scratch']
  #allocation2 [shape = 'f32[1,1]{1,0:T(1,128)}', space=vmem, size = 0x200, scoped, tag = 'scratch operand']
  %s0 = inlined_call_operand.hbm [shape: f32[200,256], index: 0, kind: input, shape index: {}]
  %s1 = inlined_call_operand.hbm [shape: f32[200,256], index: 1, kind: input, shape index: {}]
  %s2 = inlined_call_operand.hbm [shape: f32[200,256], index: 2, kind: input, shape index: {}]
  %s3 = inlined_call_operand.hbm [shape: f32[200,256], index: 3, kind: input, shape index: {}]
  %s4 = inlined_call_operand.hbm [shape: f32[1,1], index: 4, kind: output, shape index: {}]
  %s5 = sld [smem:[#allocation0]]
  $region73: #{tpu_custom_call.1} parent=0
    _
  %s7 = ssub.s32 1, %s5
  %s8 = scalar_select 0, %s7, %s5
  $region1: #{tpu_custom_call.1} parent=0
    #allocation3 [shape = 'u8[131072]{0}', space=vmem, size = 0x20000, scoped, tag = 'input window, operand 0']
    #allocation4 [shape = 's32[2]{0}', space=sflag, size = 0x8, scoped, tag = 'scoped memory for tpu_custom_call.1']
    #allocation5 [shape = 's32[2]{0}', space=sflag, size = 0x8, scoped, tag = 'scoped memory for tpu_custom_call.1']
    #allocation6 [shape = 'u8[131072]{0}', space=vmem, size = 0x20000, scoped, tag = 'input window, operand 1']
    #allocation7 [shape = 's32[2]{0}', space=sflag, size = 0x8, scoped, tag = 'scoped memory for tpu_custom_call.1']
    #allocation8 [shape = 'u8[131072]{0}', space=vmem, size = 0x20000, scoped, tag = 'input window, operand 2']
    #allocation9 [shape = 'u8[131072]{0}', space=vmem, size = 0x20000, scoped, tag = 'input window, operand 3']
    #allocation10 [shape = 's32[2]{0}', space=sflag, size = 0x8, scoped, tag = 'scoped memory for tpu_custom_call.1']
    #allocation11 [shape = 'u8[512]{0}', space=vmem, size = 0x400, scoped, tag = 'output window, operand 0, single buffered']
    %9 = vsyncpa [#allocation4], 0
    %s10 = scalar_lea.sflag [#allocation4], 1
    %11 = vsyncpa %s10, 0
    %12 = vsyncpa [#allocation7], 0
    %s13 = scalar_lea.sflag [#allocation7], 1
    %14 = vsyncpa %s13, 0
    %15 = vsyncpa [#allocation10], 0
    %s16 = scalar_lea.sflag [#allocation10], 1
    %17 = vsyncpa %s16, 0
    %18 = vsyncpa [#allocation5], 0
    loop: start=0, step=1, limit=6
    $region2: #{tpu_custom_call.1} parent=1 // loop_pre_header
      _
    $region3: #{tpu_custom_call.1} parent=1 // loop_header
      %s20 = sphi 0, %s24
      %p21 = scmp.ge.s32.totalorder %s20, 6
      %s30 = sphi 0, %s32
      %s33 = sphi 0, %s30
      %s34 = sphi 0, %s33
      %s50 = sphi 0, %s34
      %s56 = sphi 0, %s58
      %s59 = sphi 0, %s56
      %s60 = sphi 0, %s59
      %s76 = sphi 0, %s60
      %s82 = sphi 0, %s84
      %s85 = sphi 0, %s82
      %s86 = sphi 0, %s85
      %s102 = sphi 0, %s86
      %s108 = sphi 0, %s110
      %s111 = sphi 0, %s108
      %s112 = sphi 0, %s111
      %s128 = sphi 0, %s112
      %s132 = sphi 0, %s132
      %s134 = sphi 0, %s132
      %s135 = sphi 0, %s134
      %s149 = sphi 0, %s135
    $region4: #{tpu_custom_call.1} parent=1 // loop_header_branch
      %23 = sbr.rel (%p21) target = $region8
    $region5: #{tpu_custom_call.1} parent=1 // loop_body
      %s25 = ssub.s32 %s20, 1
      %s26 = ssub.s32 %s20, 2
      %s27 = sadd.s32 %s20, 1
      %s28 = ssub.s32 %s20, %s27
      %p29 = scmp.eq.s32.totalorder %s28, 0
      %s31 = sadd.s32 %s30, 1
      %s32 = scalar_select %p29, %s30, %s31
      %p35 = pneg %p29
      %p36 = scmp.eq.s32.totalorder %s20, 3
      %p37 = por %p35, %p36
      %p38 = scmp.ne.s32.totalorder %s30, %s33
      %p39 = scmp.eq.s32.totalorder %s20, 0
      %p40 = por %p38, %p39
      %p41 = scmp.ne.s32.totalorder %s30, %s33
      %p42 = scmp.eq.s32.totalorder %s25, 3
      %p43 = por %p41, %p42
      %p44 = scmp.ne.s32.totalorder %s33, %s34
      %p45 = scmp.eq.s32.totalorder %s25, 0
      %p46 = por %p44, %p45
      %p47 = scmp.ne.s32.totalorder %s33, %s34
      %p48 = scmp.eq.s32.totalorder %s26, 3
      %p49 = por %p47, %p48
      %p51 = scmp.ne.s32.totalorder %s34, %s50
      %p52 = scmp.eq.s32.totalorder %s26, 0
      %p53 = por %p51, %p52
      %s54 = ssub.s32 %s20, %s27
      %p55 = scmp.eq.s32.totalorder %s54, 0
      %s57 = sadd.s32 %s56, 1
      %s58 = scalar_select %p55, %s56, %s57
      %p61 = pneg %p55
      %p62 = scmp.eq.s32.totalorder %s20, 3
      %p63 = por %p61, %p62
      %p64 = scmp.ne.s32.totalorder %s56, %s59
      %p65 = scmp.eq.s32.totalorder %s20, 0
      %p66 = por %p64, %p65
      %p67 = scmp.ne.s32.totalorder %s56, %s59
      %p68 = scmp.eq.s32.totalorder %s25, 3
      %p69 = por %p67, %p68
      %p70 = scmp.ne.s32.totalorder %s59, %s60
      %p71 = scmp.eq.s32.totalorder %s25, 0
      %p72 = por %p70, %p71
      %p73 = scmp.ne.s32.totalorder %s59, %s60
      %p74 = scmp.eq.s32.totalorder %s26, 3
      %p75 = por %p73, %p74
      %p77 = scmp.ne.s32.totalorder %s60, %s76
      %p78 = scmp.eq.s32.totalorder %s26, 0
      %p79 = por %p77, %p78
      %s80 = ssub.s32 %s20, %s27
      %p81 = scmp.eq.s32.totalorder %s80, 0
      %s83 = sadd.s32 %s82, 1
      %s84 = scalar_select %p81, %s82, %s83
      %p87 = pneg %p81
      %p88 = scmp.eq.s32.totalorder %s20, 3
      %p89 = por %p87, %p88
      %p90 = scmp.ne.s32.totalorder %s82, %s85
      %p91 = scmp.eq.s32.totalorder %s20, 0
      %p92 = por %p90, %p91
      %p93 = scmp.ne.s32.totalorder %s82, %s85
      %p94 = scmp.eq.s32.totalorder %s25, 3
      %p95 = por %p93, %p94
      %p96 = scmp.ne.s32.totalorder %s85, %s86
      %p97 = scmp.eq.s32.totalorder %s25, 0
      %p98 = por %p96, %p97
      %p99 = scmp.ne.s32.totalorder %s85, %s86
      %p100 = scmp.eq.s32.totalorder %s26, 3
      %p101 = por %p99, %p100
      %p103 = scmp.ne.s32.totalorder %s86, %s102
      %p104 = scmp.eq.s32.totalorder %s26, 0
      %p105 = por %p103, %p104
      %s106 = ssub.s32 %s20, %s27
      %p107 = scmp.eq.s32.totalorder %s106, 0
      %s109 = sadd.s32 %s108, 1
      %s110 = scalar_select %p107, %s108, %s109
      %p113 = pneg %p107
      %p114 = scmp.eq.s32.totalorder %s20, 3
      %p115 = por %p113, %p114
      %p116 = scmp.ne.s32.totalorder %s108, %s111
      %p117 = scmp.eq.s32.totalorder %s20, 0
      %p118 = por %p116, %p117
      %p119 = scmp.ne.s32.totalorder %s108, %s111
      %p120 = scmp.eq.s32.totalorder %s25, 3
      %p121 = por %p119, %p120
      %p122 = scmp.ne.s32.totalorder %s111, %s112
      %p123 = scmp.eq.s32.totalorder %s25, 0
      %p124 = por %p122, %p123
      %p125 = scmp.ne.s32.totalorder %s111, %s112
      %p126 = scmp.eq.s32.totalorder %s26, 3
      %p127 = por %p125, %p126
      %p129 = scmp.ne.s32.totalorder %s112, %s128
      %p130 = scmp.eq.s32.totalorder %s26, 0
      %p131 = por %p129, %p130
      %s133 = sadd.s32 %s132, 1
      %p136 = scmp.eq.s32.totalorder %s20, 3
      %p137 = scmp.ne.s32.totalorder %s132, %s134
      %p138 = scmp.eq.s32.totalorder %s20, 0
      %p139 = por %p137, %p138
      %p140 = scmp.ne.s32.totalorder %s132, %s134
      %p141 = scmp.eq.s32.totalorder %s25, 3
      %p142 = por %p140, %p141
      %p143 = scmp.ne.s32.totalorder %s134, %s135
      %p144 = scmp.eq.s32.totalorder %s25, 0
      %p145 = por %p143, %p144
      %p146 = scmp.ne.s32.totalorder %s134, %s135
      %p147 = scmp.eq.s32.totalorder %s26, 3
      %p148 = por %p146, %p147
      %p150 = scmp.ne.s32.totalorder %s135, %s149
      %p151 = scmp.eq.s32.totalorder %s26, 0
      %p152 = por %p150, %p151
      %p153 = scmp.le.s32.totalorder 1, %s20
      %p154 = scmp.lt.s32.totalorder %s20, 5
      %p155 = pnand %p153, %p154
      %p156 = pneg %p155
      // Predicated region
      $region9: #{tpu_custom_call.1} parent=5 // pred_check
        _
      $region10: #{tpu_custom_call.1} parent=5 // pred_check_branch
        %158 = sbr.rel (%p155) target = $region12
      $region11: #{tpu_custom_call.1} parent=5 // pred_region
        %s159 = ssub.s32 %s20, 1
      $region12: #{tpu_custom_call.1} parent=5 // pred_fallthru
        _
      %p160 = scmp.lt.s32.totalorder %s20, 4
      // Predicated region
      $region13: #{tpu_custom_call.1} parent=5 // pred_check
        %p161 = pneg %p160
      $region14: #{tpu_custom_call.1} parent=5 // pred_check_branch
        %163 = sbr.rel (%p161) target = $region16
      $region15: #{tpu_custom_call.1} parent=5 // pred_region
        // Predicated region
        $region17: #{tpu_custom_call.1} parent=15 // pred_check
          %p164 = pneg %p40
        $region18: #{tpu_custom_call.1} parent=15 // pred_check_branch
          %166 = sbr.rel (%p164) target = $region20
        $region19: #{tpu_custom_call.1} parent=15 // pred_region
          %s167 = sand.u32 %s30, 1
          %s168 = scalar_lea.sflag [#allocation4], %s167
          %s169 = sand.u32 %s30, 1
          %s170 = smul.addr %s169, 128
          %s171 = scalar_lea.vmem [#allocation3], %s170
          %s172 = smul.u32 8, %s20
          %s173 = ssub.s32 25, %s172
          %p174 = scmp.lt.s32.totalorder %s173, 8
          %s175 = scalar_select %p174, %s173, 8
          %s176 = smul.u32 128, %s175
          %s177 = smul.u32 %s176, 2
          %s179 = ssub.s32 2048, %s177
          %180 = vsyncadd %s168, %s179
          %p181 = scmp.ne.s32.totalorder 0, %s177
          %s182 = smul.addr %s172, 2
          %s183 = smul.addr %s182, 128
          %s184 = scalar_lea.hbm %s0, %s183
          %s185 = smul.u32 16, %s175
          %s186 = sshll.u32 %s171, 4
          %s187 = int_to_ptr.vmem [resolvable:$true] %s186
          %s188 = sshll.u32 %s185, 4
          %192 = dma.hbm_to_vmem [thread:$0]  (%p181), %s184, %s188, %s187, %s168, 256, 256, 16
        $region20: #{tpu_custom_call.1} parent=15 // pred_fallthru
          _
        // Predicated region
        $region21: #{tpu_custom_call.1} parent=15 // pred_check
          %p193 = pneg %p66
        $region22: #{tpu_custom_call.1} parent=15 // pred_check_branch
          %195 = sbr.rel (%p193) target = $region24
        $region23: #{tpu_custom_call.1} parent=15 // pred_region
          %s196 = sand.u32 %s20, 1
          %s197 = scalar_lea.sflag [#allocation7], %s196
          %s198 = sand.u32 %s56, 1
          %s199 = smul.addr %s198, 128
          %s200 = scalar_lea.vmem [#allocation6], %s199
          %s201 = smul.u32 8, %s20
          %s202 = ssub.s32 25, %s201
          %p203 = scmp.lt.s32.totalorder %s202, 8
          %s204 = scalar_select %p203, %s202, 8
          %s205 = smul.u32 128, %s204
          %s206 = smul.u32 %s205, 2
          %s208 = ssub.s32 2048, %s206
          %209 = vsyncadd %s197, %s208
          %p210 = scmp.ne.s32.totalorder 0, %s206
          %s211 = smul.addr %s201, 2
          %s212 = smul.addr %s211, 128
          %s213 = scalar_lea.hbm %s1, %s212
          %s214 = smul.u32 16, %s204
          %s215 = sshll.u32 %s200, 4
          %s216 = int_to_ptr.vmem [resolvable:$true] %s215
          %s217 = sshll.u32 %s214, 4
          %221 = dma.hbm_to_vmem [thread:$0]  (%p210), %s213, %s217, %s216, %s197, 256, 256, 16
        $region24: #{tpu_custom_call.1} parent=15 // pred_fallthru
          _
        // Predicated region
        $region25: #{tpu_custom_call.1} parent=15 // pred_check
          %p222 = pneg %p92
        $region26: #{tpu_custom_call.1} parent=15 // pred_check_branch
          %224 = sbr.rel (%p222) target = $region28
        $region27: #{tpu_custom_call.1} parent=15 // pred_region
          %s225 = sand.u32 %s20, 1
          %s226 = scalar_lea.sflag [#allocation7], %s225
          %s227 = sand.u32 %s82, 1
          %s228 = smul.addr %s227, 128
          %s229 = scalar_lea.vmem [#allocation8], %s228
          %s230 = smul.u32 8, %s20
          %s231 = ssub.s32 25, %s230
          %p232 = scmp.lt.s32.totalorder %s231, 8
          %s233 = scalar_select %p232, %s231, 8
          %s234 = smul.u32 128, %s233
          %s235 = smul.u32 %s234, 2
          %s237 = ssub.s32 2048, %s235
          %238 = vsyncadd %s226, %s237
          %p239 = scmp.ne.s32.totalorder 0, %s235
          %s240 = smul.addr %s230, 2
          %s241 = smul.addr %s240, 128
          %s242 = scalar_lea.hbm %s2, %s241
          %s243 = smul.u32 16, %s233
          %s244 = sshll.u32 %s229, 4
          %s245 = int_to_ptr.vmem [resolvable:$true] %s244
          %s246 = sshll.u32 %s243, 4
          %250 = dma.hbm_to_vmem [thread:$0]  (%p239), %s242, %s246, %s245, %s226, 256, 256, 16
        $region28: #{tpu_custom_call.1} parent=15 // pred_fallthru
          _
        // Predicated region
        $region29: #{tpu_custom_call.1} parent=15 // pred_check
          %p251 = pneg %p118
        $region30: #{tpu_custom_call.1} parent=15 // pred_check_branch
          %253 = sbr.rel (%p251) target = $region32
        $region31: #{tpu_custom_call.1} parent=15 // pred_region
          %s254 = sand.u32 %s108, 1
          %s255 = scalar_lea.sflag [#allocation10], %s254
          %s256 = sand.u32 %s108, 1
          %s257 = smul.addr %s256, 128
          %s258 = scalar_lea.vmem [#allocation9], %s257
          %s259 = smul.u32 8, %s20
          %s260 = ssub.s32 25, %s259
          %p261 = scmp.lt.s32.totalorder %s260, 8
          %s262 = scalar_select %p261, %s260, 8
          %s263 = smul.u32 128, %s262
          %s264 = smul.u32 %s263, 2
          %s266 = ssub.s32 2048, %s264
          %267 = vsyncadd %s255, %s266
          %p268 = scmp.ne.s32.totalorder 0, %s264
          %s269 = smul.addr %s259, 2
          %s270 = smul.addr %s269, 128
          %s271 = scalar_lea.hbm %s3, %s270
          %s272 = smul.u32 16, %s262
          %s273 = sshll.u32 %s258, 4
          %s274 = int_to_ptr.vmem [resolvable:$true] %s273
          %s275 = sshll.u32 %s272, 4
          %279 = dma.hbm_to_vmem [thread:$0]  (%p268), %s271, %s275, %s274, %s255, 256, 256, 16
        $region32: #{tpu_custom_call.1} parent=15 // pred_fallthru
          _
      $region16: #{tpu_custom_call.1} parent=5 // pred_fallthru
        _
      %p280 = scmp.le.s32.totalorder 1, %s20
      %p281 = scmp.lt.s32.totalorder %s20, 5
      %p282 = pnand %p280, %p281
      %p283 = pneg %p282
      // Predicated region
      $region33: #{tpu_custom_call.1} parent=5 // pred_check
        _
      $region34: #{tpu_custom_call.1} parent=5 // pred_check_branch
        %285 = sbr.rel (%p282) target = $region36
      $region35: #{tpu_custom_call.1} parent=5 // pred_region
        %s286 = ssub.s32 %s20, 1
        %s287 = sand.u32 %s33, 1
        %s288 = scalar_lea.sflag [#allocation4], %s287
        %s289 = sand.u32 %s33, 1
        %s290 = smul.addr %s289, 128
        %s291 = scalar_lea.vmem [#allocation3], %s290
        // Predicated region
        $region37: #{tpu_custom_call.1} parent=35 // pred_check
          %p292 = pneg %p46
        $region38: #{tpu_custom_call.1} parent=35 // pred_check_branch
          %294 = sbr.rel (%p292) target = $region40
        $region39: #{tpu_custom_call.1} parent=35 // pred_region
          %295 = dma.done %s288, 2048
        $region40: #{tpu_custom_call.1} parent=35 // pred_fallthru
          _
        %s296 = sand.u32 %s25, 1
        %s297 = scalar_lea.sflag [#allocation7], %s296
        %s298 = sand.u32 %s59, 1
        %s299 = smul.addr %s298, 128
        %s300 = scalar_lea.vmem [#allocation6], %s299
        // Predicated region
        $region41: #{tpu_custom_call.1} parent=35 // pred_check
          %p301 = pneg %p72
        $region42: #{tpu_custom_call.1} parent=35 // pred_check_branch
          %303 = sbr.rel (%p301) target = $region44
        $region43: #{tpu_custom_call.1} parent=35 // pred_region
          %304 = dma.done %s297, 2048
        $region44: #{tpu_custom_call.1} parent=35 // pred_fallthru
          _
        %s305 = sand.u32 %s25, 1
        %s306 = scalar_lea.sflag [#allocation7], %s305
        %s307 = sand.u32 %s85, 1
        %s308 = smul.addr %s307, 128
        %s309 = scalar_lea.vmem [#allocation8], %s308
        // Predicated region
        $region45: #{tpu_custom_call.1} parent=35 // pred_check
          %p310 = pneg %p98
        $region46: #{tpu_custom_call.1} parent=35 // pred_check_branch
          %312 = sbr.rel (%p310) target = $region48
        $region47: #{tpu_custom_call.1} parent=35 // pred_region
          %313 = dma.done %s306, 2048
        $region48: #{tpu_custom_call.1} parent=35 // pred_fallthru
          _
        %s314 = sand.u32 %s111, 1
        %s315 = scalar_lea.sflag [#allocation10], %s314
        %s316 = sand.u32 %s111, 1
        %s317 = smul.addr %s316, 128
        %s318 = scalar_lea.vmem [#allocation9], %s317
        // Predicated region
        $region49: #{tpu_custom_call.1} parent=35 // pred_check
          %p319 = pneg %p124
        $region50: #{tpu_custom_call.1} parent=35 // pred_check_branch
          %321 = sbr.rel (%p319) target = $region52
        $region51: #{tpu_custom_call.1} parent=35 // pred_region
          %322 = dma.done %s315, 2048
        $region52: #{tpu_custom_call.1} parent=35 // pred_fallthru
          _
        %s323 = sand.u32 %s33, 1
        %s324 = scalar_lea.sflag [#allocation4], %s323
        %s325 = sand.u32 %s33, 1
        %s326 = smul.addr %s325, 128
        %s327 = scalar_lea.vmem [#allocation3], %s326
        %p328 = pneg %p46
        %p329 = pneg %p43
        %s330 = sand.u32 %s25, 1
        %s331 = scalar_lea.sflag [#allocation7], %s330
        %s332 = sand.u32 %s59, 1
        %s333 = smul.addr %s332, 128
        %s334 = scalar_lea.vmem [#allocation6], %s333
        %p335 = pneg %p72
        %p336 = pneg %p69
        %s337 = sand.u32 %s25, 1
        %s338 = scalar_lea.sflag [#allocation7], %s337
        %s339 = sand.u32 %s85, 1
        %s340 = smul.addr %s339, 128
        %s341 = scalar_lea.vmem [#allocation8], %s340
        %p342 = pneg %p98
        %p343 = pneg %p95
        %s344 = sand.u32 %s111, 1
        %s345 = scalar_lea.sflag [#allocation10], %s344
        %s346 = sand.u32 %s111, 1
        %s347 = smul.addr %s346, 128
        %s348 = scalar_lea.vmem [#allocation9], %s347
        %p349 = pneg %p124
        %p350 = pneg %p121
        %p351 = pneg %p145
        %p352 = pneg %p142
        %s353 = smul.u32 8, %s25
        %s354 = ssub.s32 25, %s353
        %p355 = scmp.lt.s32.totalorder %s354, 8
        %s356 = scalar_select %p355, %s354, 8
        %s357 = smul.u32 128, %s356
        %s358 = smul.u32 %s357, 2
        %s359 = smul.u32 8, %s25
        %s360 = ssub.s32 25, %s359
        %p361 = scmp.lt.s32.totalorder %s360, 8
        %s362 = scalar_select %p361, %s360, 8
        %s363 = smul.u32 128, %s362
        %s364 = smul.u32 %s363, 2
        %s365 = smul.u32 8, %s25
        %s366 = ssub.s32 25, %s365
        %p367 = scmp.lt.s32.totalorder %s366, 8
        %s368 = scalar_select %p367, %s366, 8
        %s369 = smul.u32 128, %s368
        %s370 = smul.u32 %s369, 2
        %s371 = smul.u32 8, %s25
        %s372 = ssub.s32 25, %s371
        %p373 = scmp.lt.s32.totalorder %s372, 8
        %s374 = scalar_select %p373, %s372, 8
        %s375 = smul.u32 128, %s374
        %s376 = smul.u32 %s375, 2
        %p377 = scmp.eq.s32.totalorder %s25, 0
        // Predicated region
        $region53: #{tpu_custom_call.1} parent=35 // pred_check
          %p378 = pneg %p377
        $region54: #{tpu_custom_call.1} parent=35 // pred_check_branch
          %380 = sbr.rel (%p378) target = $region56
        $region55: #{tpu_custom_call.1} parent=35 // pred_region
          %vm381 = vcmask 0
          %382 = vst.msk [vmem:[#allocation2] sm:$0x1] %vm381, 0.0
        $region56: #{tpu_custom_call.1} parent=35 // pred_fallthru
          _
        %v383 = vld [vmem:[%s291] sm:$0xff]
        %v384 = vld [vmem:[%s291 + $0x8] sm:$0xff]
        %v385 = vld [vmem:[%s291 + $0x10] sm:$0xff]
        %v386 = vld [vmem:[%s291 + $0x18] sm:$0xff]
        %v387 = vld [vmem:[%s291 + $0x20] sm:$0xff]
        %v388 = vld [vmem:[%s291 + $0x28] sm:$0xff]
        %v389 = vld [vmem:[%s291 + $0x30] sm:$0xff]
        %v390 = vld [vmem:[%s291 + $0x38] sm:$0xff]
        %v391 = vld [vmem:[%s291 + $0x40] sm:$0xff]
        %v392 = vld [vmem:[%s291 + $0x48] sm:$0xff]
        %v393 = vld [vmem:[%s291 + $0x50] sm:$0xff]
        %v394 = vld [vmem:[%s291 + $0x58] sm:$0xff]
        %v395 = vld [vmem:[%s291 + $0x60] sm:$0xff]
        %v396 = vld [vmem:[%s291 + $0x68] sm:$0xff]
        %v397 = vld [vmem:[%s291 + $0x70] sm:$0xff]
        %v398 = vld [vmem:[%s291 + $0x78] sm:$0xff]
        %v399 = vld [vmem:[%s300] sm:$0xff]
        %v400 = vld [vmem:[%s300 + $0x8] sm:$0xff]
        %v401 = vld [vmem:[%s300 + $0x10] sm:$0xff]
        %v402 = vld [vmem:[%s300 + $0x18] sm:$0xff]
        %v403 = vld [vmem:[%s300 + $0x20] sm:$0xff]
        %v404 = vld [vmem:[%s300 + $0x28] sm:$0xff]
        %v405 = vld [vmem:[%s300 + $0x30] sm:$0xff]
        %v406 = vld [vmem:[%s300 + $0x38] sm:$0xff]
        %v407 = vld [vmem:[%s300 + $0x40] sm:$0xff]
        %v408 = vld [vmem:[%s300 + $0x48] sm:$0xff]
        %v409 = vld [vmem:[%s300 + $0x50] sm:$0xff]
        %v410 = vld [vmem:[%s300 + $0x58] sm:$0xff]
        %v411 = vld [vmem:[%s300 + $0x60] sm:$0xff]
        %v412 = vld [vmem:[%s300 + $0x68] sm:$0xff]
        %v413 = vld [vmem:[%s300 + $0x70] sm:$0xff]
        %v414 = vld [vmem:[%s300 + $0x78] sm:$0xff]
        %v415 = vld [vmem:[%s309] sm:$0xff]
        %v416 = vld [vmem:[%s309 + $0x8] sm:$0xff]
        %v417 = vld [vmem:[%s309 + $0x10] sm:$0xff]
        %v418 = vld [vmem:[%s309 + $0x18] sm:$0xff]
        %v419 = vld [vmem:[%s309 + $0x20] sm:$0xff]
        %v420 = vld [vmem:[%s309 + $0x28] sm:$0xff]
        %v421 = vld [vmem:[%s309 + $0x30] sm:$0xff]
        %v422 = vld [vmem:[%s309 + $0x38] sm:$0xff]
        %v423 = vld [vmem:[%s309 + $0x40] sm:$0xff]
        %v424 = vld [vmem:[%s309 + $0x48] sm:$0xff]
        %v425 = vld [vmem:[%s309 + $0x50] sm:$0xff]
        %v426 = vld [vmem:[%s309 + $0x58] sm:$0xff]
        %v427 = vld [vmem:[%s309 + $0x60] sm:$0xff]
        %v428 = vld [vmem:[%s309 + $0x68] sm:$0xff]
        %v429 = vld [vmem:[%s309 + $0x70] sm:$0xff]
        %v430 = vld [vmem:[%s309 + $0x78] sm:$0xff]
        %v431 = vld [vmem:[%s318] sm:$0xff]
        %v432 = vld [vmem:[%s318 + $0x8] sm:$0xff]
        %v433 = vld [vmem:[%s318 + $0x10] sm:$0xff]
        %v434 = vld [vmem:[%s318 + $0x18] sm:$0xff]
        %v435 = vld [vmem:[%s318 + $0x20] sm:$0xff]
        %v436 = vld [vmem:[%s318 + $0x28] sm:$0xff]
        %v437 = vld [vmem:[%s318 + $0x30] sm:$0xff]
        %v438 = vld [vmem:[%s318 + $0x38] sm:$0xff]
        %v439 = vld [vmem:[%s318 + $0x40] sm:$0xff]
        %v440 = vld [vmem:[%s318 + $0x48] sm:$0xff]
        %v441 = vld [vmem:[%s318 + $0x50] sm:$0xff]
        %v442 = vld [vmem:[%s318 + $0x58] sm:$0xff]
        %v443 = vld [vmem:[%s318 + $0x60] sm:$0xff]
        %v444 = vld [vmem:[%s318 + $0x68] sm:$0xff]
        %v445 = vld [vmem:[%s318 + $0x70] sm:$0xff]
        %v446 = vld [vmem:[%s318 + $0x78] sm:$0xff]
        %v447 = vsub.f32 %v383, %v399
        %v448 = vsub.f32 %v384, %v400
        %v449 = vsub.f32 %v385, %v401
        %v450 = vsub.f32 %v386, %v402
        %v451 = vsub.f32 %v387, %v403
        %v452 = vsub.f32 %v388, %v404
        %v453 = vsub.f32 %v389, %v405
        %v454 = vsub.f32 %v390, %v406
        %v455 = vsub.f32 %v391, %v407
        %v456 = vsub.f32 %v392, %v408
        %v457 = vsub.f32 %v393, %v409
        %v458 = vsub.f32 %v394, %v410
        %v459 = vsub.f32 %v395, %v411
        %v460 = vsub.f32 %v396, %v412
        %v461 = vsub.f32 %v397, %v413
        %v462 = vsub.f32 %v398, %v414
        %v463 = vsub.f32 %v383, %v415
        %v464 = vsub.f32 %v384, %v416
        %v465 = vsub.f32 %v385, %v417
        %v466 = vsub.f32 %v386, %v418
        %v467 = vsub.f32 %v387, %v419
        %v468 = vsub.f32 %v388, %v420
        %v469 = vsub.f32 %v389, %v421
        %v470 = vsub.f32 %v390, %v422
        %v471 = vsub.f32 %v391, %v423
        %v472 = vsub.f32 %v392, %v424
        %v473 = vsub.f32 %v393, %v425
        %v474 = vsub.f32 %v394, %v426
        %v475 = vsub.f32 %v395, %v427
        %v476 = vsub.f32 %v396, %v428
        %v477 = vsub.f32 %v397, %v429
        %v478 = vsub.f32 %v398, %v430
        %v479 = vsub.f32 %v415, %v431
        %v480 = vsub.f32 %v416, %v432
        %v481 = vsub.f32 %v417, %v433
        %v482 = vsub.f32 %v418, %v434
        %v483 = vsub.f32 %v419, %v435
        %v484 = vsub.f32 %v420, %v436
        %v485 = vsub.f32 %v421, %v437
        %v486 = vsub.f32 %v422, %v438
        %v487 = vsub.f32 %v423, %v439
        %v488 = vsub.f32 %v424, %v440
        %v489 = vsub.f32 %v425, %v441
        %v490 = vsub.f32 %v426, %v442
        %v491 = vsub.f32 %v427, %v443
        %v492 = vsub.f32 %v428, %v444
        %v493 = vsub.f32 %v429, %v445
        %v494 = vsub.f32 %v430, %v446
        %v495 = vmul.f32 %v447, %v447
        %v496 = vmul.f32 %v448, %v448
        %v497 = vmul.f32 %v449, %v449
        %v498 = vmul.f32 %v450, %v450
        %v499 = vmul.f32 %v451, %v451
        %v500 = vmul.f32 %v452, %v452
        %v501 = vmul.f32 %v453, %v453
        %v502 = vmul.f32 %v454, %v454
        %v503 = vmul.f32 %v455, %v455
        %v504 = vmul.f32 %v456, %v456
        %v505 = vmul.f32 %v457, %v457
        %v506 = vmul.f32 %v458, %v458
        %v507 = vmul.f32 %v459, %v459
        %v508 = vmul.f32 %v460, %v460
        %v509 = vmul.f32 %v461, %v461
        %v510 = vmul.f32 %v462, %v462
        %v511 = vmul.f32 %v463, %v463
        %v512 = vmul.f32 %v464, %v464
        %v513 = vmul.f32 %v465, %v465
        %v514 = vmul.f32 %v466, %v466
        %v515 = vmul.f32 %v467, %v467
        %v516 = vmul.f32 %v468, %v468
        %v517 = vmul.f32 %v469, %v469
        %v518 = vmul.f32 %v470, %v470
        %v519 = vmul.f32 %v471, %v471
        %v520 = vmul.f32 %v472, %v472
        %v521 = vmul.f32 %v473, %v473
        %v522 = vmul.f32 %v474, %v474
        %v523 = vmul.f32 %v475, %v475
        %v524 = vmul.f32 %v476, %v476
        %v525 = vmul.f32 %v477, %v477
        %v526 = vmul.f32 %v478, %v478
        %v527 = vsub.f32 %v495, %v511
        %v528 = vsub.f32 %v496, %v512
        %v529 = vsub.f32 %v497, %v513
        %v530 = vsub.f32 %v498, %v514
        %v531 = vsub.f32 %v499, %v515
        %v532 = vsub.f32 %v500, %v516
        %v533 = vsub.f32 %v501, %v517
        %v534 = vsub.f32 %v502, %v518
        %v535 = vsub.f32 %v503, %v519
        %v536 = vsub.f32 %v504, %v520
        %v537 = vsub.f32 %v505, %v521
        %v538 = vsub.f32 %v506, %v522
        %v539 = vsub.f32 %v507, %v523
        %v540 = vsub.f32 %v508, %v524
        %v541 = vsub.f32 %v509, %v525
        %v542 = vsub.f32 %v510, %v526
        %v543 = vadd.f32 %v527, %v528
        %544 = vadd.xlane.f32.xlu0 %v543
        %v545 = vpop.xlane.xlu0 %544
        %v546 = vadd.f32 %v529, %v530
        %547 = vadd.xlane.f32.xlu0 %v546
        %v548 = vpop.xlane.xlu0 %547
        %v549 = vadd.f32 %v531, %v532
        %550 = vadd.xlane.f32.xlu0 %v549
        %v551 = vpop.xlane.xlu0 %550
        %v552 = vadd.f32 %v533, %v534
        %553 = vadd.xlane.f32.xlu0 %v552
        %v554 = vpop.xlane.xlu0 %553
        %v555 = vadd.f32 %v535, %v536
        %556 = vadd.xlane.f32.xlu0 %v555
        %v557 = vpop.xlane.xlu0 %556
        %v558 = vadd.f32 %v537, %v538
        %559 = vadd.xlane.f32.xlu0 %v558
        %v560 = vpop.xlane.xlu0 %559
        %v561 = vadd.f32 %v539, %v540
        %562 = vadd.xlane.f32.xlu0 %v561
        %v563 = vpop.xlane.xlu0 %562
        %v564 = vadd.f32 %v541, %v542
        %565 = vadd.xlane.f32.xlu0 %v564
        %v566 = vpop.xlane.xlu0 %565
        %v567 = vmul.f32 %v479, %v479
        %v568 = vmul.f32 %v480, %v480
        %v569 = vmul.f32 %v481, %v481
        %v570 = vmul.f32 %v482, %v482
        %v571 = vmul.f32 %v483, %v483
        %v572 = vmul.f32 %v484, %v484
        %v573 = vmul.f32 %v485, %v485
        %v574 = vmul.f32 %v486, %v486
        %v575 = vmul.f32 %v487, %v487
        %v576 = vmul.f32 %v488, %v488
        %v577 = vmul.f32 %v489, %v489
        %v578 = vmul.f32 %v490, %v490
        %v579 = vmul.f32 %v491, %v491
        %v580 = vmul.f32 %v492, %v492
        %v581 = vmul.f32 %v493, %v493
        %v582 = vmul.f32 %v494, %v494
        %v583 = vsub.f32 %v495, %v567
        %v584 = vsub.f32 %v496, %v568
        %v585 = vsub.f32 %v497, %v569
        %v586 = vsub.f32 %v498, %v570
        %v587 = vsub.f32 %v499, %v571
        %v588 = vsub.f32 %v500, %v572
        %v589 = vsub.f32 %v501, %v573
        %v590 = vsub.f32 %v502, %v574
        %v591 = vsub.f32 %v503, %v575
        %v592 = vsub.f32 %v504, %v576
        %v593 = vsub.f32 %v505, %v577
        %v594 = vsub.f32 %v506, %v578
        %v595 = vsub.f32 %v507, %v579
        %v596 = vsub.f32 %v508, %v580
        %v597 = vsub.f32 %v509, %v581
        %v598 = vsub.f32 %v510, %v582
        %v599 = vadd.f32 %v583, %v584
        %600 = vadd.xlane.f32.xlu0 %v599
        %v601 = vpop.xlane.xlu0 %600
        %v602 = vadd.f32 %v585, %v586
        %603 = vadd.xlane.f32.xlu0 %v602
        %v604 = vpop.xlane.xlu0 %603
        %v605 = vadd.f32 %v587, %v588
        %606 = vadd.xlane.f32.xlu0 %v605
        %v607 = vpop.xlane.xlu0 %606
        %v608 = vadd.f32 %v589, %v590
        %609 = vadd.xlane.f32.xlu0 %v608
        %v610 = vpop.xlane.xlu0 %609
        %v611 = vadd.f32 %v591, %v592
        %612 = vadd.xlane.f32.xlu0 %v611
        %v613 = vpop.xlane.xlu0 %612
        %v614 = vadd.f32 %v593, %v594
        %615 = vadd.xlane.f32.xlu0 %v614
        %v616 = vpop.xlane.xlu0 %615
        %v617 = vadd.f32 %v595, %v596
        %618 = vadd.xlane.f32.xlu0 %v617
        %v619 = vpop.xlane.xlu0 %618
        %v620 = vadd.f32 %v597, %v598
        %621 = vadd.xlane.f32.xlu0 %v620
        %v622 = vpop.xlane.xlu0 %621
        %v623 = vadd.f32 %v545, 2.0
        %v624 = vadd.f32 %v548, 2.0
        %v625 = vadd.f32 %v551, 2.0
        %v626 = vadd.f32 %v554, 2.0
        %v627 = vadd.f32 %v557, 2.0
        %v628 = vadd.f32 %v560, 2.0
        %v629 = vadd.f32 %v563, 2.0
        %v630 = vadd.f32 %v566, 2.0
        %v631 = vmax.f32 %v623, 0.0
        %v632 = vmax.f32 %v624, 0.0
        %v633 = vmax.f32 %v625, 0.0
        %v634 = vmax.f32 %v626, 0.0
        %v635 = vmax.f32 %v627, 0.0
        %v636 = vmax.f32 %v628, 0.0
        %v637 = vmax.f32 %v629, 0.0
        %v638 = vmax.f32 %v630, 0.0
        %v639 = vadd.f32 %v601, 1.0
        %v640 = vadd.f32 %v604, 1.0
        %v641 = vadd.f32 %v607, 1.0
        %v642 = vadd.f32 %v610, 1.0
        %v643 = vadd.f32 %v613, 1.0
        %v644 = vadd.f32 %v616, 1.0
        %v645 = vadd.f32 %v619, 1.0
        %v646 = vadd.f32 %v622, 1.0
        %v647 = vmax.f32 %v639, 0.0
        %v648 = vmax.f32 %v640, 0.0
        %v649 = vmax.f32 %v641, 0.0
        %v650 = vmax.f32 %v642, 0.0
        %v651 = vmax.f32 %v643, 0.0
        %v652 = vmax.f32 %v644, 0.0
        %v653 = vmax.f32 %v645, 0.0
        %v654 = vmax.f32 %v646, 0.0
        %v655 = vadd.f32 %v631, %v647
        %v656 = vadd.f32 %v632, %v648
        %v657 = vadd.f32 %v633, %v649
        %v658 = vadd.f32 %v634, %v650
        %v659 = vadd.f32 %v635, %v651
        %v660 = vadd.f32 %v636, %v652
        %v661 = vadd.f32 %v637, %v653
        %v662 = vadd.f32 %v638, %v654
        %s663 = smul.u32 %s25, 64
        %v664 = vlaneseq
        %v665 = vshrl.u32 %v664, 7
        %v666 = vadd.s32 %v665, 8
        %v667 = vadd.s32 %v665, 16
        %v668 = vadd.s32 %v665, 24
        %v669 = vadd.s32 %v665, 32
        %v670 = vadd.s32 %v665, 40
        %v671 = vadd.s32 %v665, 48
        %v672 = vadd.s32 %v665, 56
        %v673 = vstv %s663
        %v674 = vadd.s32 %v673, %v665
        %v675 = vadd.s32 %v673, %v666
        %v676 = vadd.s32 %v673, %v667
        %v677 = vadd.s32 %v673, %v668
        %v678 = vadd.s32 %v673, %v669
        %v679 = vadd.s32 %v673, %v670
        %v680 = vadd.s32 %v673, %v671
        %v681 = vadd.s32 %v673, %v672
        %vm682 = vcmp.lt.s32.totalorder %v674, 200
        %vm683 = vcmp.lt.s32.totalorder %v675, 200
        %vm684 = vcmp.lt.s32.totalorder %v676, 200
        %vm685 = vcmp.lt.s32.totalorder %v677, 200
        %vm686 = vcmp.lt.s32.totalorder %v678, 200
        %vm687 = vcmp.lt.s32.totalorder %v679, 200
        %vm688 = vcmp.lt.s32.totalorder %v680, 200
        %vm689 = vcmp.lt.s32.totalorder %v681, 200
        %v690 = vsel %vm682, %v655, 0.0
        %v691 = vsel %vm683, %v656, 0.0
        %v692 = vsel %vm684, %v657, 0.0
        %v693 = vsel %vm685, %v658, 0.0
        %v694 = vsel %vm686, %v659, 0.0
        %v695 = vsel %vm687, %v660, 0.0
        %v696 = vsel %vm688, %v661, 0.0
        %v697 = vsel %vm689, %v662, 0.0
        %v698 = vld [vmem:[#allocation2] sm:$0x1]
        %v699 = vadd.f32 %v690, %v691
        %v700 = vadd.f32 %v699, %v692
        %v701 = vadd.f32 %v700, %v693
        %v702 = vadd.f32 %v701, %v694
        %v703 = vadd.f32 %v702, %v695
        %v704 = vadd.f32 %v703, %v696
        %v705 = vadd.f32 %v704, %v697
        %v706 = vrot.slane %v705, 4
        %v707 = vadd.f32 %v705, %v706
        %v708 = vrot.slane %v707, 2
        %v709 = vadd.f32 %v707, %v708
        %v710 = vrot.slane %v709, 1
        %v711 = vadd.f32 %v709, %v710
        %v712 = vadd.f32 %v698, %v711
        %vm713 = vcmask 0
        %714 = vst.msk [vmem:[#allocation2] sm:$0x1] %vm713, %v712
        %p715 = scmp.eq.s32.totalorder %s25, 3
        // Predicated region
        $region57: #{tpu_custom_call.1} parent=35 // pred_check
          %p716 = pneg %p715
        $region58: #{tpu_custom_call.1} parent=35 // pred_check_branch
          %718 = sbr.rel (%p716) target = $region60
        $region59: #{tpu_custom_call.1} parent=35 // pred_region
          %v719 = vld [vmem:[#allocation2] sm:$0x1]
          %v720 = vmul.f32 %v719, 0.005
          %721 = vst.msk [vmem:[#allocation11] sm:$0x1] %vm713, %v720
        $region60: #{tpu_custom_call.1} parent=35 // pred_fallthru
          _
        // Predicated region
        $region61: #{tpu_custom_call.1} parent=35 // pred_check
          %p722 = pneg %p142
        $region62: #{tpu_custom_call.1} parent=35 // pred_check_branch
          %724 = sbr.rel (%p722) target = $region64
        $region63: #{tpu_custom_call.1} parent=35 // pred_region
          %s726 = ssub.s32 16, 16
          %727 = vsyncadd [#allocation5], %s726
          %s729 = sshll.u32 [#allocation11], 4
          %s730 = int_to_ptr.vmem [resolvable:$true] %s729
          %732 = dma.vmem_to_hbm [thread:$0]  %s730, 16, %s4, [#allocation5]
        $region64: #{tpu_custom_call.1} parent=35 // pred_fallthru
          _
        // Predicated region
        $region65: #{tpu_custom_call.1} parent=35 // pred_check
          %p733 = pneg %p142
        $region66: #{tpu_custom_call.1} parent=35 // pred_check_branch
          %735 = sbr.rel (%p733) target = $region68
        $region67: #{tpu_custom_call.1} parent=35 // pred_region
          %736 = dma.done [#allocation5], 16
        $region68: #{tpu_custom_call.1} parent=35 // pred_fallthru
          _
      $region36: #{tpu_custom_call.1} parent=5 // pred_fallthru
        _
      %p737 = scmp.le.s32.totalorder 2, %s20
      // Predicated region
      $region69: #{tpu_custom_call.1} parent=5 // pred_check
        %p738 = pneg %p737
      $region70: #{tpu_custom_call.1} parent=5 // pred_check_branch
        %740 = sbr.rel (%p738) target = $region72
      $region71: #{tpu_custom_call.1} parent=5 // pred_region
        %s741 = ssub.s32 %s20, 2
      $region72: #{tpu_custom_call.1} parent=5 // pred_fallthru
        _
    $region6: #{tpu_custom_call.1} parent=1 // loop_footer
      %s24 = sadd.s32 1, %s20
    $region7: #{tpu_custom_call.1} parent=1 // loop_footer_branch
      %19 = sbr.rel target = $region3
    $region8: #{tpu_custom_call.1} parent=1 // loop_exit
      _
    %742 = vsyncpa [#allocation4], 1
    %s743 = scalar_lea.sflag [#allocation4], 1
    %744 = vsyncpa %s743, 1
    %745 = vsyncpa [#allocation7], 1
    %s746 = scalar_lea.sflag [#allocation7], 1
    %747 = vsyncpa %s746, 1
    %748 = vsyncpa [#allocation10], 1
    %s749 = scalar_lea.sflag [#allocation10], 1
    %750 = vsyncpa %s749, 1
    %751 = vsyncpa [#allocation5], 1
    %s752 = scalar_lea.sflag [#allocation5], 1
    %753 = vsyncpa %s752, 1

</llo_original>
